<compile_context>
chip_gen: v6e
topology: v6e:2x2x1
jax: 0.10.0
libtpu: 0.0.40
codegen_flags: <defaults>
</compile_context>

<pallas_src>
import functools

import jax
import jax.numpy as jnp
import numpy as np
from jax import lax
from jax.experimental import pallas as pl
from jax.experimental.pallas import tpu as pltpu


def _round_up(x, m):
    return (x + m - 1) // m * m


def _double_attention_kernel(x_ref, wp_ref, bv_ref, wr_ref, bo_ref, o_ref,
                             *, bt, c_m_p, c_n_p):
    """One grid step processes `bt` batch elements.

    x_ref:  (bt, C, HW)      f32, HW on the lane axis
    wp_ref: (Cp, C)          bf16 fused projection weight [A_pad | B_pad | V_pad]
    bv_ref: (c_n_p, 1)       f32 convV bias (padded rows = -1e9 so they vanish
                             from the channel softmax)
    wr_ref: (C_out, c_m_p)   f32 reconstruct weight (zero cols for padding)
    bo_ref: (C_out, 1)       f32 fused output bias = Wr@ba + br
    o_ref:  (bt, C_out, HW)  f32
    """
    wp = wp_ref[...]
    bv = bv_ref[...]
    wr = wr_ref[...]
    b_out = bo_ref[...]

    def body(bi, carry):
        x = x_ref[bi]                                                   # (C, HW)

        # Fused 1x1 convs (A|B|V): one bf16 MXU matmul, f32 accumulation.
        proj = jnp.dot(wp, x.astype(jnp.bfloat16),
                       preferred_element_type=jnp.float32)              # (Cp, HW)

        # Tile-aligned static slices (segment starts are multiples of 8).
        A = proj[0:c_m_p]                                               # (c_m_p, HW)
        B = proj[c_m_p:c_m_p + c_n_p]                                   # (c_n_p, HW)
        V = proj[c_m_p + c_n_p:c_m_p + 2 * c_n_p] + bv                  # (c_n_p, HW)

        # attention_maps softmax over HW (lanes); normalization deferred to gd.
        eB = jnp.exp(B - jnp.max(B, axis=1, keepdims=True))             # (c_n_p, HW)
        inv_sB = pl.reciprocal(jnp.sum(eB, axis=1, keepdims=True),
                               approx=True)                             # (c_n_p, 1)

        # attention_vectors softmax over channels (sublanes); normalization
        # deferred to the final (C_out, HW) result.
        eV = jnp.exp(V - jnp.max(V, axis=0, keepdims=True))             # (c_n_p, HW)
        inv_sV = pl.reciprocal(jnp.sum(eV, axis=0, keepdims=True),
                               approx=True)                             # (1, HW)

        # global_descriptors^T = eB @ A^T, scaled per row by 1/sum(eB).
        # (Transposed form so the 1/sB scale broadcasts without a transpose.)
        # TODO(synk): if the bundle dump shows an XLU vxpose of the (_, HW)
        # operand saturating at large HW, produce A pre-transposed instead.
        gdT = lax.dot_general(eB, A, (((1,), (1,)), ((), ())),
                              preferred_element_type=jnp.float32)       # (c_n_p, c_m_p)
        gdT = gdT * inv_sB

        # Reassociated reconstruct: wg = Wr @ gd, plus the fused bias b_out
        # broadcast over the c_n columns (recovered exactly after the deferred
        # 1/sum(eV) scaling because softmax columns sum to 1).
        wg = lax.dot_general(wr, gdT, (((1,), (1,)), ((), ())),
                             preferred_element_type=jnp.float32)        # (C_out, c_n_p)
        wg = wg + b_out

        # out = (wg @ eV) / sum(eV): lane-dense (C_out, HW) store.
        out = jnp.dot(wg.astype(jnp.bfloat16), eV.astype(jnp.bfloat16),
                      preferred_element_type=jnp.float32) * inv_sV
        o_ref[bi] = out.astype(o_ref.dtype)
        return carry

    if bt == 1:
        body(0, 0)
    else:
        lax.fori_loop(0, bt, body, 0)


def _vmem_limit_bytes():
    cap = 64 << 20  # v7x per-TensorCore VMEM: safe floor on every generation
    try:
        info = pltpu.get_tpu_info()
        cap = int(getattr(info, "vmem_capacity_bytes", cap))
    except Exception:
        pass
    cap = max(cap, 32 << 20)
    # Leave ~1/8 headroom for Mosaic internal scratch; never ask above 128 MiB.
    return min(cap - cap // 8, 128 << 20)


def _pick_batch_tile(b, per_batch_io_bytes, resident_bytes, vmem_limit):
    """Largest bt dividing b whose double-buffered x/out blocks plus resident
    weights/intermediates fit the VMEM budget; prefer >=4 grid steps (so both
    v7x TensorCores get >=2 pipelined iterations), else >=2, else 1."""
    budget = int(0.75 * vmem_limit)
    fits = [bt for bt in range(1, b + 1)
            if b % bt == 0 and 2 * bt * per_batch_io_bytes + resident_bytes <= budget]
    if not fits:
        return 1
    for min_steps in (4, 2, 1):
        ok = [bt for bt in fits if b // bt >= min_steps]
        if ok:
            return max(ok)
    return 1


def double_attention(x_nchw, params, *, batch_tile=None):
    """x_nchw: (B, C, H, W) float32. params: dict of channel-last weights."""
    b, c, h, w = x_nchw.shape
    hw = h * w
    c_m = params["wa"].shape[1]
    c_n = params["wb"].shape[1]
    c_out = params["wr"].shape[1]

    # Pad each projection segment to a multiple of 8 rows (f32 sublane tile)
    # so the in-kernel slices of `proj` are tile-aligned, zero-cost views.
    c_m_p = _round_up(c_m, 8)
    c_n_p = _round_up(c_n, 8)
    cp = c_m_p + 2 * c_n_p

    # NCHW -> (B, C, HW): a pure reshape, HW on lanes; no transposes anywhere.
    x = x_nchw.reshape(b, c, hw)

    f32 = jnp.float32
    wa_t = jnp.pad(params["wa"].T.astype(f32), ((0, c_m_p - c_m), (0, 0)))
    wb_t = jnp.pad(params["wb"].T.astype(f32), ((0, c_n_p - c_n), (0, 0)))
    wv_t = jnp.pad(params["wv"].T.astype(f32), ((0, c_n_p - c_n), (0, 0)))
    w_proj = jnp.concatenate([wa_t, wb_t, wv_t], axis=0).astype(jnp.bfloat16)  # (Cp, C)

    # convB bias is a no-op under the spatial softmax -> dropped entirely.
    # convV bias feeds the channel softmax -> kept; padded rows get -1e9 so
    # they contribute exp(.) == 0 to the softmax denominator.
    bv_pad = jnp.pad(params["bv"].T.astype(f32), ((0, c_n_p - c_n), (0, 0)),
                     constant_values=-1e9)                              # (c_n_p, 1)

    w_rec = jnp.pad(params["wr"].T.astype(f32), ((0, 0), (0, c_m_p - c_m)))  # (C_out, c_m_p)
    ba_pad = jnp.pad(params["ba"].T.astype(f32), ((0, c_m_p - c_m), (0, 0)))
    # convA bias + reconstruct bias collapse into one output-channel bias.
    b_out = w_rec @ ba_pad + params["br"].T.astype(f32)                 # (C_out, 1)

    vmem_limit = _vmem_limit_bytes()
    per_batch_io = (c + c_out) * hw * 4                                  # f32 x + out block
    resident = (w_proj.size * 2
                + (bv_pad.size + w_rec.size + b_out.size) * 4
                + (cp + 2 * c_n_p + c_out) * hw * 4)                     # weights + per-iter live
    bt = batch_tile if batch_tile is not None else _pick_batch_tile(
        b, per_batch_io, resident, vmem_limit)
    assert b % bt == 0, "batch must be divisible by the batch tile"
    grid = (b // bt,)

    kernel = functools.partial(_double_attention_kernel,
                               bt=bt, c_m_p=c_m_p, c_n_p=c_n_p)

    # TODO(synk): tiling HW (very large feature maps) needs an online-softmax /
    # accumulated-gd scheme; at these sizes the full HW extent fits one block.
    out = pl.pallas_call(
        kernel,
        out_shape=jax.ShapeDtypeStruct((b, c_out, hw), x.dtype),
        grid=grid,
        in_specs=[
            pl.BlockSpec((bt, c, hw), lambda i: (i, 0, 0)),      # x, bt batches/step
            pl.BlockSpec((cp, c), lambda i: (0, 0)),             # fused proj weight (bf16)
            pl.BlockSpec((c_n_p, 1), lambda i: (0, 0)),          # convV bias (padded)
            pl.BlockSpec((c_out, c_m_p), lambda i: (0, 0)),      # reconstruct weight
            pl.BlockSpec((c_out, 1), lambda i: (0, 0)),          # fused output bias
        ],
        out_specs=pl.BlockSpec((bt, c_out, hw), lambda i: (i, 0, 0)),
        compiler_params=pltpu.CompilerParams(
            dimension_semantics=("parallel",),
            vmem_limit_bytes=vmem_limit),
    )(x, w_proj, bv_pad, w_rec, b_out)

    # (B, C_out, HW) -> NCHW: pure reshape, no transpose.
    return out.reshape(b, c_out, h, w)


def _reference(x_nchw, params):
    """Pure-JAX replica of the PyTorch forward (NCHW semantics)."""
    b, c, h, w = x_nchw.shape
    hw = h * w
    x = jnp.transpose(x_nchw.reshape(b, c, hw), (0, 2, 1))           # (B, HW, C)
    A = x @ params["wa"] + params["ba"]                              # (B, HW, c_m)
    B = x @ params["wb"] + params["bb"]                              # (B, HW, c_n)
    V = x @ params["wv"] + params["bv"]                              # (B, HW, c_n)
    attn_maps = jax.nn.softmax(B, axis=1)                            # softmax over HW
    attn_vecs = jax.nn.softmax(V, axis=2)                            # softmax over c_n
    gd = jnp.einsum("bpm,bpn->bmn", A, attn_maps)                    # (B, c_m, c_n)
    z = jnp.einsum("bmn,bpn->bpm", gd, attn_vecs)                    # (B, HW, c_m)
    out = z @ params["wr"] + params["br"]                            # (B, HW, C)
    c_out = out.shape[-1]
    return jnp.transpose(out, (0, 2, 1)).reshape(b, c_out, h, w)


def make_params(key, in_channels, c_m, c_n):
    """Deterministic synthetic weights. Channel-last layout: W has shape
    (C_in, C_out) == PyTorch conv weight[:, :, 0, 0].T ; bias shape (1, C_out)."""
    ks = jax.random.split(key, 8)
    s = 0.1
    return {
        "wa": s * jax.random.normal(ks[0], (in_channels, c_m), jnp.float32),
        "ba": s * jax.random.normal(ks[1], (1, c_m), jnp.float32),
        "wb": s * jax.random.normal(ks[2], (in_channels, c_n), jnp.float32),
        "bb": s * jax.random.normal(ks[3], (1, c_n), jnp.float32),
        "wv": s * jax.random.normal(ks[4], (in_channels, c_n), jnp.float32),
        "bv": s * jax.random.normal(ks[5], (1, c_n), jnp.float32),
        "wr": s * jax.random.normal(ks[6], (c_m, in_channels), jnp.float32),
        "br": s * jax.random.normal(ks[7], (1, in_channels), jnp.float32),
    }


if __name__ == "__main__":
    key = jax.random.PRNGKey(0)
    k_x, k_p = jax.random.split(key)

    batch, in_channels, height, width = 2, 4, 16, 16
    c_m, c_n = 4, 4

    x = jax.random.normal(k_x, (batch, in_channels, height, width), jnp.float32)
    params = make_params(k_p, in_channels, c_m, c_n)

    out = double_attention(x, params)
    out = jax.block_until_ready(out)

    ref = _reference(x, params)
    # Tolerance covers bf16 MXU operands + EUP approx-reciprocal softmax
    # denominators; a genuine logic bug (wrong softmax axis etc.) is O(1e-1).
    np.testing.assert_allclose(np.asarray(out), np.asarray(ref),
                               rtol=1e-2, atol=5e-3)

    print("KERNEL_OK")
</pallas_src>

<mosaic_0001>
module attributes {stable_mosaic.version = 11 : i64} {
  func.func @_double_attention_kernel(%arg0: i32, %arg1: memref<1x4x256xf32, #tpu.memory_space<vmem>>, %arg2: memref<24x4xbf16, #tpu.memory_space<vmem>>, %arg3: memref<8x1xf32, #tpu.memory_space<vmem>>, %arg4: memref<4x8xf32, #tpu.memory_space<vmem>>, %arg5: memref<4x1xf32, #tpu.memory_space<vmem>>, %arg6: memref<1x4x256xf32, #tpu.memory_space<vmem>>) attributes {dimension_semantics = [#tpu.dimension_semantics<parallel>], iteration_bounds = array<i64: 2>, scalar_prefetch = 0 : i64, scratch_operands = 0 : i64, tpu.core_type = #tpu.core_type<tc>, window_params = [{transform_indices = @transform_0, window_bounds = array<i64: 1, 4, 256>}, {pipeline_mode = #tpu.pipeline_mode<synchronous>, transform_indices = @transform_1, window_bounds = array<i64: 24, 4>}, {pipeline_mode = #tpu.pipeline_mode<synchronous>, transform_indices = @transform_2, window_bounds = array<i64: 8, 1>}, {pipeline_mode = #tpu.pipeline_mode<synchronous>, transform_indices = @transform_3, window_bounds = array<i64: 4, 8>}, {pipeline_mode = #tpu.pipeline_mode<synchronous>, transform_indices = @transform_4, window_bounds = array<i64: 4, 1>}, {transform_indices = @transform_5, window_bounds = array<i64: 1, 4, 256>}]} {
    %c0 = arith.constant 0 : index
    %c0_0 = arith.constant 0 : index
    %0 = vector.load %arg2[%c0, %c0_0] : memref<24x4xbf16, #tpu.memory_space<vmem>>, vector<24x4xbf16>
    %c0_1 = arith.constant 0 : index
    %c0_2 = arith.constant 0 : index
    %1 = vector.load %arg3[%c0_1, %c0_2] : memref<8x1xf32, #tpu.memory_space<vmem>>, vector<8x1xf32>
    %c0_3 = arith.constant 0 : index
    %c0_4 = arith.constant 0 : index
    %2 = vector.load %arg4[%c0_3, %c0_4] : memref<4x8xf32, #tpu.memory_space<vmem>>, vector<4x8xf32>
    %c0_5 = arith.constant 0 : index
    %c0_6 = arith.constant 0 : index
    %3 = vector.load %arg5[%c0_5, %c0_6] : memref<4x1xf32, #tpu.memory_space<vmem>>, vector<4x1xf32>
    %c0_7 = arith.constant 0 : index
    %c0_8 = arith.constant 0 : index
    %c0_9 = arith.constant 0 : index
    %4 = vector.load %arg1[%c0_7, %c0_8, %c0_9] : memref<1x4x256xf32, #tpu.memory_space<vmem>>, vector<1x4x256xf32>
    %5 = vector.shape_cast %4 : vector<1x4x256xf32> to vector<4x256xf32>
    %6 = arith.truncf %5 : vector<4x256xf32> to vector<4x256xbf16>
    %cst = arith.constant dense<0.000000e+00> : vector<24x256xf32>
    %7 = tpu.matmul %0, %6, %cst {dimension_numbers = #tpu.dot_dimension_numbers<[1], [0], [0], [1], [0, 0, 1, 1], [], []>} : vector<24x4xbf16>, vector<4x256xbf16>, vector<24x256xf32> -> vector<24x256xf32>
    %8 = vector.extract_strided_slice %7 {offsets = [0, 0], sizes = [8, 256], strides = [1, 1]} : vector<24x256xf32> to vector<8x256xf32>
    %9 = vector.extract_strided_slice %7 {offsets = [8, 0], sizes = [8, 256], strides = [1, 1]} : vector<24x256xf32> to vector<8x256xf32>
    %10 = vector.extract_strided_slice %7 {offsets = [16, 0], sizes = [8, 256], strides = [1, 1]} : vector<24x256xf32> to vector<8x256xf32>
    %11 = vector.broadcast %1 : vector<8x1xf32> to vector<8x256xf32>
    %12 = arith.addf %10, %11 : vector<8x256xf32>
    %cst_10 = arith.constant dense<0xFF800000> : vector<8xf32>
    %13 = vector.multi_reduction <maximumf>, %9, %cst_10 [1] : vector<8x256xf32> to vector<8xf32>
    %14 = vector.shape_cast %13 : vector<8xf32> to vector<8x1xf32>
    %15 = vector.broadcast %14 : vector<8x1xf32> to vector<8x256xf32>
    %16 = arith.subf %9, %15 : vector<8x256xf32>
    %17 = math.exp %16 : vector<8x256xf32>
    %cst_11 = arith.constant dense<0.000000e+00> : vector<8xf32>
    %18 = vector.multi_reduction <add>, %17, %cst_11 [1] : vector<8x256xf32> to vector<8xf32>
    %19 = vector.shape_cast %18 : vector<8xf32> to vector<8x1xf32>
    %20 = tpu.reciprocal %19 {approx = true} : vector<8x1xf32> -> vector<8x1xf32>
    %cst_12 = arith.constant dense<0xFF800000> : vector<256xf32>
    %21 = vector.multi_reduction <maximumf>, %12, %cst_12 [0] : vector<8x256xf32> to vector<256xf32>
    %22 = vector.shape_cast %21 : vector<256xf32> to vector<1x256xf32>
    %23 = vector.broadcast %22 : vector<1x256xf32> to vector<8x256xf32>
    %24 = arith.subf %12, %23 : vector<8x256xf32>
    %25 = math.exp %24 : vector<8x256xf32>
    %cst_13 = arith.constant dense<0.000000e+00> : vector<256xf32>
    %26 = vector.multi_reduction <add>, %25, %cst_13 [0] : vector<8x256xf32> to vector<256xf32>
    %27 = vector.shape_cast %26 : vector<256xf32> to vector<1x256xf32>
    %28 = tpu.reciprocal %27 {approx = true} : vector<1x256xf32> -> vector<1x256xf32>
    %cst_14 = arith.constant dense<0.000000e+00> : vector<8x8xf32>
    %29 = tpu.matmul %17, %8, %cst_14 {dimension_numbers = #tpu.dot_dimension_numbers<[1], [1], [0], [0], [0, 0, 1, 0], [], []>} : vector<8x256xf32>, vector<8x256xf32>, vector<8x8xf32> -> vector<8x8xf32>
    %30 = vector.broadcast %20 : vector<8x1xf32> to vector<8x8xf32>
    %31 = arith.mulf %29, %30 : vector<8x8xf32>
    %cst_15 = arith.constant dense<0.000000e+00> : vector<4x8xf32>
    %32 = tpu.matmul %2, %31, %cst_15 {dimension_numbers = #tpu.dot_dimension_numbers<[1], [1], [0], [0], [0, 0, 1, 0], [], []>} : vector<4x8xf32>, vector<8x8xf32>, vector<4x8xf32> -> vector<4x8xf32>
    %33 = vector.broadcast %3 : vector<4x1xf32> to vector<4x8xf32>
    %34 = arith.addf %32, %33 : vector<4x8xf32>
    %35 = arith.truncf %34 : vector<4x8xf32> to vector<4x8xbf16>
    %36 = arith.truncf %25 : vector<8x256xf32> to vector<8x256xbf16>
    %cst_16 = arith.constant dense<0.000000e+00> : vector<4x256xf32>
    %37 = tpu.matmul %35, %36, %cst_16 {dimension_numbers = #tpu.dot_dimension_numbers<[1], [0], [0], [1], [0, 0, 1, 1], [], []>} : vector<4x8xbf16>, vector<8x256xbf16>, vector<4x256xf32> -> vector<4x256xf32>
    %38 = vector.broadcast %28 : vector<1x256xf32> to vector<4x256xf32>
    %39 = arith.mulf %37, %38 : vector<4x256xf32>
    %c0_17 = arith.constant 0 : index
    %c0_18 = arith.constant 0 : index
    %c0_19 = arith.constant 0 : index
    %40 = vector.load %arg6[%c0_17, %c0_18, %c0_19] : memref<1x4x256xf32, #tpu.memory_space<vmem>>, vector<1x4x256xf32>
    %41 = vector.shape_cast %40 : vector<1x4x256xf32> to vector<4x256xf32>
    %42 = vector.shape_cast %39 : vector<4x256xf32> to vector<1x4x256xf32>
    tpu.vector_store %arg6[%c0_17, %c0_18, %c0_19], %42 {strides = array<i32>} : memref<1x4x256xf32, #tpu.memory_space<vmem>>, vector<1x4x256xf32>,
    return
  }
  func.func @transform_0(%arg0: i32) -> (i32, i32, i32) {
    %c0_i32 = arith.constant 0 : i32
    %c0_i32_0 = arith.constant 0 : i32
    %c0_i32_1 = arith.constant 0 : i32
    return %arg0, %c0_i32, %c0_i32_0 : i32, i32, i32
  }
  func.func @transform_1(%arg0: i32) -> (i32, i32) {
    %c0_i32 = arith.constant 0 : i32
    %c0_i32_0 = arith.constant 0 : i32
    %c0_i32_1 = arith.constant 0 : i32
    return %c0_i32, %c0_i32_0 : i32, i32
  }
  func.func @transform_2(%arg0: i32) -> (i32, i32) {
    %c0_i32 = arith.constant 0 : i32
    %c0_i32_0 = arith.constant 0 : i32
    %c0_i32_1 = arith.constant 0 : i32
    return %c0_i32, %c0_i32_0 : i32, i32
  }
  func.func @transform_3(%arg0: i32) -> (i32, i32) {
    %c0_i32 = arith.constant 0 : i32
    %c0_i32_0 = arith.constant 0 : i32
    %c0_i32_1 = arith.constant 0 : i32
    return %c0_i32, %c0_i32_0 : i32, i32
  }
  func.func @transform_4(%arg0: i32) -> (i32, i32) {
    %c0_i32 = arith.constant 0 : i32
    %c0_i32_0 = arith.constant 0 : i32
    %c0_i32_1 = arith.constant 0 : i32
    return %c0_i32, %c0_i32_0 : i32, i32
  }
  func.func @transform_5(%arg0: i32) -> (i32, i32, i32) {
    %c0_i32 = arith.constant 0 : i32
    %c0_i32_0 = arith.constant 0 : i32
    %c0_i32_1 = arith.constant 0 : i32
    return %arg0, %c0_i32, %c0_i32_0 : i32, i32, i32
  }
}

</mosaic_0001>

<llo_original>
// kernel: tpu_custom_call.1
$region0: #{tpu_custom_call.1}
  #allocation0 [shape = 'u32[]', space=smem, size = 0x4, offset = 0x4, fixed_abs, tag = 'smem constant byte address 0x4 - core index']
  #allocation1 [shape = 'u32[144,128]{1,0:T(1,128)}', space=vmem, size = 0x12000, scoped, tag = 'internal scratch']
  %s0 = inlined_call_operand.vmem [shape: f32[2,4,256], index: 0, kind: input, shape index: {}]
  %s1 = inlined_call_operand.vmem [shape: bf16[24,4], index: 1, kind: input, shape index: {}]
  %s2 = inlined_call_operand.vmem [shape: f32[8,1], index: 2, kind: input, shape index: {}]
  %s3 = inlined_call_operand.vmem [shape: f32[4,8], index: 3, kind: input, shape index: {}]
  %s4 = inlined_call_operand.vmem [shape: f32[4,1], index: 4, kind: input, shape index: {}]
  %s5 = inlined_call_operand.hbm [shape: f32[2,4,256], index: 5, kind: output, shape index: {}]
  %s6 = sld [smem:[#allocation0]]
  $region53: #{tpu_custom_call.1} parent=0
    _
  %s8 = ssub.s32 1, %s6
  %s9 = scalar_select 0, %s8, %s6
  $region1: #{tpu_custom_call.1} parent=0
    #allocation2 [shape = 'u8[8192]{0}', space=vmem, size = 0x2000, scoped, tag = 'output window, operand 0']
    #allocation3 [shape = 's32[2]{0}', space=sflag, size = 0x8, scoped, tag = 'scoped memory for tpu_custom_call.1']
    %10 = vsyncpa [#allocation3], 0
    %s11 = scalar_lea.sflag [#allocation3], 1
    %12 = vsyncpa %s11, 0
    loop: start=0, step=1, limit=4
    $region2: #{tpu_custom_call.1} parent=1 // loop_pre_header
      _
    $region3: #{tpu_custom_call.1} parent=1 // loop_header
      %s14 = sphi 0, %s18
      %p15 = scmp.ge.s32.totalorder %s14, 4
      %s24 = sphi 0, %s26
      %s27 = sphi 0, %s24
      %s28 = sphi 0, %s27
      %s44 = sphi 0, %s28
      %s48 = sphi 0, %s48
      %s50 = sphi 0, %s48
      %s51 = sphi 0, %s50
      %s65 = sphi 0, %s51
      %s69 = sphi 0, %s69
      %s71 = sphi 0, %s69
      %s72 = sphi 0, %s71
      %s86 = sphi 0, %s72
      %s90 = sphi 0, %s90
      %s92 = sphi 0, %s90
      %s93 = sphi 0, %s92
      %s107 = sphi 0, %s93
      %s111 = sphi 0, %s111
      %s113 = sphi 0, %s111
      %s114 = sphi 0, %s113
      %s128 = sphi 0, %s114
      %s134 = sphi 0, %s136
      %s137 = sphi 0, %s134
      %s138 = sphi 0, %s137
      %s154 = sphi 0, %s138
    $region4: #{tpu_custom_call.1} parent=1 // loop_header_branch
      %17 = sbr.rel (%p15) target = $region8
    $region5: #{tpu_custom_call.1} parent=1 // loop_body
      %s19 = ssub.s32 %s14, 1
      %s20 = ssub.s32 %s14, 2
      %s21 = sadd.s32 %s14, 1
      %s22 = ssub.s32 %s14, %s21
      %p23 = scmp.eq.s32.totalorder %s22, 0
      %s25 = sadd.s32 %s24, 1
      %s26 = scalar_select %p23, %s24, %s25
      %p29 = pneg %p23
      %p30 = scmp.eq.s32.totalorder %s14, 1
      %p31 = por %p29, %p30
      %p32 = scmp.ne.s32.totalorder %s24, %s27
      %p33 = scmp.eq.s32.totalorder %s14, 0
      %p34 = por %p32, %p33
      %p35 = scmp.ne.s32.totalorder %s24, %s27
      %p36 = scmp.eq.s32.totalorder %s19, 1
      %p37 = por %p35, %p36
      %p38 = scmp.ne.s32.totalorder %s27, %s28
      %p39 = scmp.eq.s32.totalorder %s19, 0
      %p40 = por %p38, %p39
      %p41 = scmp.ne.s32.totalorder %s27, %s28
      %p42 = scmp.eq.s32.totalorder %s20, 1
      %p43 = por %p41, %p42
      %p45 = scmp.ne.s32.totalorder %s28, %s44
      %p46 = scmp.eq.s32.totalorder %s20, 0
      %p47 = por %p45, %p46
      %s49 = sadd.s32 %s48, 1
      %p52 = scmp.eq.s32.totalorder %s14, 1
      %p53 = scmp.ne.s32.totalorder %s48, %s50
      %p54 = scmp.eq.s32.totalorder %s14, 0
      %p55 = por %p53, %p54
      %p56 = scmp.ne.s32.totalorder %s48, %s50
      %p57 = scmp.eq.s32.totalorder %s19, 1
      %p58 = por %p56, %p57
      %p59 = scmp.ne.s32.totalorder %s50, %s51
      %p60 = scmp.eq.s32.totalorder %s19, 0
      %p61 = por %p59, %p60
      %p62 = scmp.ne.s32.totalorder %s50, %s51
      %p63 = scmp.eq.s32.totalorder %s20, 1
      %p64 = por %p62, %p63
      %p66 = scmp.ne.s32.totalorder %s51, %s65
      %p67 = scmp.eq.s32.totalorder %s20, 0
      %p68 = por %p66, %p67
      %s70 = sadd.s32 %s69, 1
      %p73 = scmp.eq.s32.totalorder %s14, 1
      %p74 = scmp.ne.s32.totalorder %s69, %s71
      %p75 = scmp.eq.s32.totalorder %s14, 0
      %p76 = por %p74, %p75
      %p77 = scmp.ne.s32.totalorder %s69, %s71
      %p78 = scmp.eq.s32.totalorder %s19, 1
      %p79 = por %p77, %p78
      %p80 = scmp.ne.s32.totalorder %s71, %s72
      %p81 = scmp.eq.s32.totalorder %s19, 0
      %p82 = por %p80, %p81
      %p83 = scmp.ne.s32.totalorder %s71, %s72
      %p84 = scmp.eq.s32.totalorder %s20, 1
      %p85 = por %p83, %p84
      %p87 = scmp.ne.s32.totalorder %s72, %s86
      %p88 = scmp.eq.s32.totalorder %s20, 0
      %p89 = por %p87, %p88
      %s91 = sadd.s32 %s90, 1
      %p94 = scmp.eq.s32.totalorder %s14, 1
      %p95 = scmp.ne.s32.totalorder %s90, %s92
      %p96 = scmp.eq.s32.totalorder %s14, 0
      %p97 = por %p95, %p96
      %p98 = scmp.ne.s32.totalorder %s90, %s92
      %p99 = scmp.eq.s32.totalorder %s19, 1
      %p100 = por %p98, %p99
      %p101 = scmp.ne.s32.totalorder %s92, %s93
      %p102 = scmp.eq.s32.totalorder %s19, 0
      %p103 = por %p101, %p102
      %p104 = scmp.ne.s32.totalorder %s92, %s93
      %p105 = scmp.eq.s32.totalorder %s20, 1
      %p106 = por %p104, %p105
      %p108 = scmp.ne.s32.totalorder %s93, %s107
      %p109 = scmp.eq.s32.totalorder %s20, 0
      %p110 = por %p108, %p109
      %s112 = sadd.s32 %s111, 1
      %p115 = scmp.eq.s32.totalorder %s14, 1
      %p116 = scmp.ne.s32.totalorder %s111, %s113
      %p117 = scmp.eq.s32.totalorder %s14, 0
      %p118 = por %p116, %p117
      %p119 = scmp.ne.s32.totalorder %s111, %s113
      %p120 = scmp.eq.s32.totalorder %s19, 1
      %p121 = por %p119, %p120
      %p122 = scmp.ne.s32.totalorder %s113, %s114
      %p123 = scmp.eq.s32.totalorder %s19, 0
      %p124 = por %p122, %p123
      %p125 = scmp.ne.s32.totalorder %s113, %s114
      %p126 = scmp.eq.s32.totalorder %s20, 1
      %p127 = por %p125, %p126
      %p129 = scmp.ne.s32.totalorder %s114, %s128
      %p130 = scmp.eq.s32.totalorder %s20, 0
      %p131 = por %p129, %p130
      %s132 = ssub.s32 %s14, %s21
      %p133 = scmp.eq.s32.totalorder %s132, 0
      %s135 = sadd.s32 %s134, 1
      %s136 = scalar_select %p133, %s134, %s135
      %p139 = pneg %p133
      %p140 = scmp.eq.s32.totalorder %s14, 1
      %p141 = por %p139, %p140
      %p142 = scmp.ne.s32.totalorder %s134, %s137
      %p143 = scmp.eq.s32.totalorder %s14, 0
      %p144 = por %p142, %p143
      %p145 = scmp.ne.s32.totalorder %s134, %s137
      %p146 = scmp.eq.s32.totalorder %s19, 1
      %p147 = por %p145, %p146
      %p148 = scmp.ne.s32.totalorder %s137, %s138
      %p149 = scmp.eq.s32.totalorder %s19, 0
      %p150 = por %p148, %p149
      %p151 = scmp.ne.s32.totalorder %s137, %s138
      %p152 = scmp.eq.s32.totalorder %s20, 1
      %p153 = por %p151, %p152
      %p155 = scmp.ne.s32.totalorder %s138, %s154
      %p156 = scmp.eq.s32.totalorder %s20, 0
      %p157 = por %p155, %p156
      %p158 = scmp.le.s32.totalorder 1, %s14
      %p159 = scmp.lt.s32.totalorder %s14, 3
      %p160 = pnand %p158, %p159
      %p161 = pneg %p160
      // Predicated region
      $region9: #{tpu_custom_call.1} parent=5 // pred_check
        _
      $region10: #{tpu_custom_call.1} parent=5 // pred_check_branch
        %163 = sbr.rel (%p160) target = $region12
      $region11: #{tpu_custom_call.1} parent=5 // pred_region
        %s164 = ssub.s32 %s14, 1
        // Predicated region
        $region13: #{tpu_custom_call.1} parent=11 // pred_check
          %p165 = pneg %p61
        $region14: #{tpu_custom_call.1} parent=11 // pred_check_branch
          %167 = sbr.rel (%p165) target = $region16
        $region15: #{tpu_custom_call.1} parent=11 // pred_region
          _
        $region16: #{tpu_custom_call.1} parent=11 // pred_fallthru
          _
        // Predicated region
        $region17: #{tpu_custom_call.1} parent=11 // pred_check
          %p168 = pneg %p82
        $region18: #{tpu_custom_call.1} parent=11 // pred_check_branch
          %170 = sbr.rel (%p168) target = $region20
        $region19: #{tpu_custom_call.1} parent=11 // pred_region
          _
        $region20: #{tpu_custom_call.1} parent=11 // pred_fallthru
          _
        // Predicated region
        $region21: #{tpu_custom_call.1} parent=11 // pred_check
          %p171 = pneg %p103
        $region22: #{tpu_custom_call.1} parent=11 // pred_check_branch
          %173 = sbr.rel (%p171) target = $region24
        $region23: #{tpu_custom_call.1} parent=11 // pred_region
          _
        $region24: #{tpu_custom_call.1} parent=11 // pred_fallthru
          _
        // Predicated region
        $region25: #{tpu_custom_call.1} parent=11 // pred_check
          %p174 = pneg %p124
        $region26: #{tpu_custom_call.1} parent=11 // pred_check_branch
          %176 = sbr.rel (%p174) target = $region28
        $region27: #{tpu_custom_call.1} parent=11 // pred_region
          _
        $region28: #{tpu_custom_call.1} parent=11 // pred_fallthru
          _
      $region12: #{tpu_custom_call.1} parent=5 // pred_fallthru
        _
      %p177 = scmp.lt.s32.totalorder %s14, 2
      // Predicated region
      $region29: #{tpu_custom_call.1} parent=5 // pred_check
        %p178 = pneg %p177
      $region30: #{tpu_custom_call.1} parent=5 // pred_check_branch
        %180 = sbr.rel (%p178) target = $region32
      $region31: #{tpu_custom_call.1} parent=5 // pred_region
        // Predicated region
        $region33: #{tpu_custom_call.1} parent=31 // pred_check
          %p181 = pneg %p34
        $region34: #{tpu_custom_call.1} parent=31 // pred_check_branch
          %183 = sbr.rel (%p181) target = $region36
        $region35: #{tpu_custom_call.1} parent=31 // pred_region
          %p184 = scmp.lt.s32.totalorder %s14, 1
          %s185 = scalar_select %p184, %s14, 1
          %s186 = smul.addr %s185, 2
          %s187 = smul.addr %s186, 4
          %s188 = scalar_lea.vmem %s0, %s187
        $region36: #{tpu_custom_call.1} parent=31 // pred_fallthru
          _
      $region32: #{tpu_custom_call.1} parent=5 // pred_fallthru
        _
      %p189 = scmp.le.s32.totalorder 1, %s14
      %p190 = scmp.lt.s32.totalorder %s14, 3
      %p191 = pnand %p189, %p190
      %p192 = pneg %p191
      // Predicated region
      $region37: #{tpu_custom_call.1} parent=5 // pred_check
        _
      $region38: #{tpu_custom_call.1} parent=5 // pred_check_branch
        %194 = sbr.rel (%p191) target = $region40
      $region39: #{tpu_custom_call.1} parent=5 // pred_region
        %s195 = ssub.s32 %s14, 1
        %p196 = scmp.lt.s32.totalorder %s19, 1
        %s197 = scalar_select %p196, %s19, 1
        %s198 = smul.addr %s197, 2
        %s199 = smul.addr %s198, 4
        %s200 = scalar_lea.vmem %s0, %s199
        %p201 = pneg %p40
        %p202 = pneg %p37
        %p203 = pneg %p61
        %p204 = pneg %p58
        %p205 = pneg %p82
        %p206 = pneg %p79
        %p207 = pneg %p103
        %p208 = pneg %p100
        %p209 = pneg %p124
        %p210 = pneg %p121
        %p211 = pneg %p150
        %p212 = pneg %p147
        %s213 = sand.u32 %s137, 1
        %s214 = scalar_lea.sflag [#allocation3], %s213
        %s215 = sand.u32 %s137, 1
        %s216 = smul.addr %s215, 8
        %s217 = scalar_lea.vmem [#allocation2], %s216
        %p218 = scmp.lt.s32.totalorder %s19, 1
        %s219 = scalar_select %p218, %s19, 1
        %s220 = smul.addr %s219, 2
        %s221 = smul.addr %s220, 4
        %s222 = scalar_lea.vmem %s0, %s221
        %v224 = vld [vmem:[%s1] sm:$0xf]
        %v225 = vld [vmem:[%s1 + $0x4] sm:$0xf]
        %v226 = vld [vmem:[%s1 + $0x8] sm:$0xf]
        %v227 = vld [vmem:[%s2] sm:$0xff]
        %v228 = vld [vmem:[%s3] sm:$0xf]
        %v229 = vld [vmem:[%s4] sm:$0xf]
        %v230 = vld [vmem:[%s222] sm:$0xff]
        %v232 = vcombine.high %v230, %v230
        %v234 = vpack.c.bf16 %v230, %v230
        %v235 = vpack.c.bf16 %v232, %v232
        %v239 = vunpack.c.l.b16 %v224
        %v240 = vunpack.c.l.b16 %v225
        %v241 = vunpack.c.l.b16 %v226
        %v242 = vpack.c.b16 %v240, %v239
        %v243 = vpack.c.b16 %v241, %v241
        %vm244 = vcmask 31744
        %v246 = vsel %vm244, %v242, 0
        %v249 = vsel %vm244, %v243, 0
        %vm251 = vcmask 1041408
        %v253 = vsel %vm251, %v234, 0
        %v256 = vsel %vm251, %v235, 0
        %258 = vmatprep.subr.bf16.mxu0 0
        %259 = vmatpush1.bf16.msra.mxu0 0
        %260 = vmatprep.subr.bf16.mxu0 0
        %261 = vmatpush1.bf16.msra.mxu0 0
        %262 = vmatprep.subr.bf16.mxu0 0
        %263 = vmatpush1.bf16.msra.mxu0 0
        %264 = vmatprep.subr.bf16.mxu0 0
        %265 = vmatpush1.bf16.msra.mxu0 0
        %266 = vmatprep.subr.bf16.mxu0 0
        %267 = vmatpush1.bf16.msra.mxu0 0
        %268 = vmatprep.subr.bf16.mxu0 0
        %269 = vmatpush1.bf16.msra.mxu0 0
        %270 = vmatprep.subr.bf16.mxu0 0
        %271 = vmatpush1.bf16.msra.mxu0 0
        %272 = vmatprep.subr.bf16.mxu0 %v256
        %273 = vmatpush1.bf16.msra.mxu0 %v253
        %274 = vmatprep.subr.bf16.mxu0 0
        %275 = vmatpush2.bf16.msra.mxu0 0
        %276 = vmatprep.subr.bf16.mxu0 0
        %277 = vmatpush2.bf16.msra.mxu0 0
        %278 = vmatprep.subr.bf16.mxu0 0
        %279 = vmatpush2.bf16.msra.mxu0 0
        %280 = vmatprep.subr.bf16.mxu0 0
        %281 = vmatpush2.bf16.msra.mxu0 0
        %282 = vmatprep.subr.bf16.mxu0 0
        %283 = vmatpush2.bf16.msra.mxu0 0
        %284 = vmatprep.subr.bf16.mxu0 0
        %285 = vmatpush2.bf16.msra.mxu0 0
        %286 = vmatprep.subr.bf16.mxu0 0
        %287 = vmatpush2.bf16.msra.mxu0 0
        %288 = vmatprep.subr.bf16.mxu0 0
        %289 = vmatpush2.bf16.msra.mxu0 0
        %290 = vmatprep.mubr.bf16.mxu0 0
        %291 = vmatmul.mubr.bf16.gmra.mxu0 %v246
        %v292 = vpop.f32.mrf.mxu0
        %v293 = vadd.f32 0.0, %v292
        %v294 = vpop.f32.mrf.mxu0
        %v295 = vadd.f32 0.0, %v294
        %v296 = vpop.f32.mrf.mxu0
        %v297 = vadd.f32 0.0, %v296
        %v298 = vpop.f32.mrf.mxu0
        %v299 = vadd.f32 0.0, %v298
        %300 = vmatprep.mubr.bf16.mxu0 0
        %301 = vmatmul.mubr.bf16.gmra.mxu0 %v249
        %v302 = vpop.f32.mrf.mxu0
        %v303 = vadd.f32 0.0, %v302
        %v304 = vpop.f32.mrf.mxu0
        %v305 = vadd.f32 0.0, %v304
        %v306 = vpop.f32.mrf.mxu0
        %v307 = vpop.f32.mrf.mxu0
        %308 = vdwg.mxu0
        %310 = vset.pattern.permute.xlu0 0
        %311 = vperm.xlu0 %310, %v227
        %v312 = vpop.permute.xlu0 %311
        %v314 = vadd.f32 %v303, %v312
        %v315 = vadd.f32 %v305, %v312
        %v316 = vmax.f32 %v297, %v299
        %317 = vmax.xlane.f32.xlu0 %v316
        %v318 = vpop.xlane.xlu0 %317
        %v319 = vsub.f32 %v297, %v318
        %v320 = vsub.f32 %v299, %v318
        %v321 = vmul.f32 %v319, 1.442695
        %v322 = vpow.pop %v321
        %v323 = vmul.f32 %v320, 1.442695
        %v324 = vpow.pop %v323
        %v325 = vadd.f32 %v322, %v324
        %326 = vadd.xlane.f32.xlu0 %v325
        %v327 = vpop.xlane.xlu0 %326
        %v328 = vrcp.pop %v327
        %v329 = vrot.slane %v314, 4
        %v330 = vmax.f32 %v314, %v329
        %v331 = vrot.slane %v330, 2
        %v332 = vmax.f32 %v330, %v331
        %v333 = vrot.slane %v332, 1
        %v334 = vmax.f32 %v332, %v333
        %v335 = vrot.slane %v315, 4
        %v336 = vmax.f32 %v315, %v335
        %v337 = vrot.slane %v336, 2
        %v338 = vmax.f32 %v336, %v337
        %v339 = vrot.slane %v338, 1
        %v340 = vmax.f32 %v338, %v339
        %v341 = vsub.f32 %v314, %v334
        %v342 = vsub.f32 %v315, %v340
        %v343 = vmul.f32 %v341, 1.442695
        %v344 = vpow.pop %v343
        %v345 = vmul.f32 %v342, 1.442695
        %v346 = vpow.pop %v345
        %v347 = vrot.slane %v344, 4
        %v348 = vadd.f32 %v344, %v347
        %v349 = vrot.slane %v348, 2
        %v350 = vadd.f32 %v348, %v349
        %v351 = vrot.slane %v350, 1
        %v352 = vadd.f32 %v350, %v351
        %v353 = vrot.slane %v346, 4
        %v354 = vadd.f32 %v346, %v353
        %v355 = vrot.slane %v354, 2
        %v356 = vadd.f32 %v354, %v355
        %v357 = vrot.slane %v356, 1
        %v358 = vadd.f32 %v356, %v357
        %v359 = vrcp.pop %v352
        %v360 = vrcp.pop %v358
        %361 = vmatprep.subr.mxu0 0.0
        %362 = vmatpush1.xpose.msra.mxu0 0.0
        %363 = vmatprep.subr.mxu0 0.0
        %364 = vmatpush1.xpose.msra.mxu0 0.0
        %365 = vmatprep.subr.mxu0 0.0
        %366 = vmatpush1.xpose.msra.mxu0 0.0
        %367 = vmatprep.subr.mxu0 0.0
        %368 = vmatpush1.xpose.msra.mxu0 0.0
        %369 = vmatprep.subr.mxu0 0.0
        %370 = vmatpush1.xpose.msra.mxu0 0.0
        %371 = vmatprep.subr.mxu0 0.0
        %372 = vmatpush1.xpose.msra.mxu0 0.0
        %373 = vmatprep.subr.mxu0 0.0
        %374 = vmatpush1.xpose.msra.mxu0 0.0
        %375 = vmatprep.subr.mxu0 0.0
        %376 = vmatpush1.xpose.msra.mxu0 0.0
        %377 = vmatprep.subr.mxu0 0.0
        %378 = vmatpush1.xpose.msra.mxu0 0.0
        %379 = vmatprep.subr.mxu0 0.0
        %380 = vmatpush1.xpose.msra.mxu0 0.0
        %381 = vmatprep.subr.mxu0 0.0
        %382 = vmatpush1.xpose.msra.mxu0 0.0
        %383 = vmatprep.subr.mxu0 0.0
        %384 = vmatpush1.xpose.msra.mxu0 0.0
        %385 = vmatprep.subr.mxu0 0.0
        %386 = vmatpush1.xpose.msra.mxu0 0.0
        %387 = vmatprep.subr.mxu0 0.0
        %388 = vmatpush1.xpose.msra.mxu0 0.0
        %389 = vmatprep.subr.mxu0 0.0
        %390 = vmatpush1.xpose.msra.mxu0 0.0
        %391 = vmatprep.subr.mxu0 %v295
        %392 = vmatpush1.xpose.msra.mxu0 %v293
        %393 = vmatprep.subr.mxu0 0.0
        %394 = vmatpush2.xpose.msra.mxu0 0.0
        %395 = vmatprep.subr.mxu0 0.0
        %396 = vmatpush2.xpose.msra.mxu0 0.0
        %397 = vmatprep.subr.mxu0 0.0
        %398 = vmatpush2.xpose.msra.mxu0 0.0
        %399 = vmatprep.subr.mxu0 0.0
        %400 = vmatpush2.xpose.msra.mxu0 0.0
        %401 = vmatprep.subr.mxu0 0.0
        %402 = vmatpush2.xpose.msra.mxu0 0.0
        %403 = vmatprep.subr.mxu0 0.0
        %404 = vmatpush2.xpose.msra.mxu0 0.0
        %405 = vmatprep.subr.mxu0 0.0
        %406 = vmatpush2.xpose.msra.mxu0 0.0
        %407 = vmatprep.subr.mxu0 0.0
        %408 = vmatpush2.xpose.msra.mxu0 0.0
        %409 = vmatprep.subr.mxu0 0.0
        %410 = vmatpush2.xpose.msra.mxu0 0.0
        %411 = vmatprep.subr.mxu0 0.0
        %412 = vmatpush2.xpose.msra.mxu0 0.0
        %413 = vmatprep.subr.mxu0 0.0
        %414 = vmatpush2.xpose.msra.mxu0 0.0
        %415 = vmatprep.subr.mxu0 0.0
        %416 = vmatpush2.xpose.msra.mxu0 0.0
        %417 = vmatprep.subr.mxu0 0.0
        %418 = vmatpush2.xpose.msra.mxu0 0.0
        %419 = vmatprep.subr.mxu0 0.0
        %420 = vmatpush2.xpose.msra.mxu0 0.0
        %421 = vmatprep.subr.mxu0 0.0
        %422 = vmatpush2.xpose.msra.mxu0 0.0
        %423 = vmatprep.subr.mxu0 0.0
        %424 = vmatpush2.xpose.msra.mxu0 0.0
        %425 = vmatprep.mubr.f32.mxu0 %v324
        %426 = vmatmul.mubr.f32.gmra.mxu0 %v322
        %v427 = vpop.f32.mrf.mxu0
        %v428 = vadd.f32 0.0, %v427
        %v429 = vpop.f32.mrf.mxu0
        %430 = vdwg.mxu0
        %v431 = vmul.f32 %v428, %v328
        %433 = vset.pattern.permute.xlu0 0
        %434 = vperm.xlu0 %433, %v229
        %v435 = vpop.permute.xlu0 %434
        %vm437 = vcmask 64512
        %v439 = vsel %vm437, %v228, 0
        %v442 = vsel %vm437, %v431, 0
        %444 = vmatprep.subr.mxu0 0.0
        %445 = vmatpush1.xpose.msra.mxu0 0.0
        %446 = vmatprep.subr.mxu0 0.0
        %447 = vmatpush1.xpose.msra.mxu0 0.0
        %448 = vmatprep.subr.mxu0 0.0
        %449 = vmatpush1.xpose.msra.mxu0 0.0
        %450 = vmatprep.subr.mxu0 0.0
        %451 = vmatpush1.xpose.msra.mxu0 0.0
        %452 = vmatprep.subr.mxu0 0.0
        %453 = vmatpush1.xpose.msra.mxu0 0.0
        %454 = vmatprep.subr.mxu0 0.0
        %455 = vmatpush1.xpose.msra.mxu0 0.0
        %456 = vmatprep.subr.mxu0 0.0
        %457 = vmatpush1.xpose.msra.mxu0 0.0
        %458 = vmatprep.subr.mxu0 0.0
        %459 = vmatpush1.xpose.msra.mxu0 0.0
        %460 = vmatprep.subr.mxu0 0.0
        %461 = vmatpush1.xpose.msra.mxu0 0.0
        %462 = vmatprep.subr.mxu0 0.0
        %463 = vmatpush1.xpose.msra.mxu0 0.0
        %464 = vmatprep.subr.mxu0 0.0
        %465 = vmatpush1.xpose.msra.mxu0 0.0
        %466 = vmatprep.subr.mxu0 0.0
        %467 = vmatpush1.xpose.msra.mxu0 0.0
        %468 = vmatprep.subr.mxu0 0.0
        %469 = vmatpush1.xpose.msra.mxu0 0.0
        %470 = vmatprep.subr.mxu0 0.0
        %471 = vmatpush1.xpose.msra.mxu0 0.0
        %472 = vmatprep.subr.mxu0 0.0
        %473 = vmatpush1.xpose.msra.mxu0 0.0
        %474 = vmatprep.subr.mxu0 0.0
        %475 = vmatpush1.xpose.msra.mxu0 %v442
        %476 = vmatprep.subr.mxu0 0.0
        %477 = vmatpush2.xpose.msra.mxu0 0.0
        %478 = vmatprep.subr.mxu0 0.0
        %479 = vmatpush2.xpose.msra.mxu0 0.0
        %480 = vmatprep.subr.mxu0 0.0
        %481 = vmatpush2.xpose.msra.mxu0 0.0
        %482 = vmatprep.subr.mxu0 0.0
        %483 = vmatpush2.xpose.msra.mxu0 0.0
        %484 = vmatprep.subr.mxu0 0.0
        %485 = vmatpush2.xpose.msra.mxu0 0.0
        %486 = vmatprep.subr.mxu0 0.0
        %487 = vmatpush2.xpose.msra.mxu0 0.0
        %488 = vmatprep.subr.mxu0 0.0
        %489 = vmatpush2.xpose.msra.mxu0 0.0
        %490 = vmatprep.subr.mxu0 0.0
        %491 = vmatpush2.xpose.msra.mxu0 0.0
        %492 = vmatprep.subr.mxu0 0.0
        %493 = vmatpush2.xpose.msra.mxu0 0.0
        %494 = vmatprep.subr.mxu0 0.0
        %495 = vmatpush2.xpose.msra.mxu0 0.0
        %496 = vmatprep.subr.mxu0 0.0
        %497 = vmatpush2.xpose.msra.mxu0 0.0
        %498 = vmatprep.subr.mxu0 0.0
        %499 = vmatpush2.xpose.msra.mxu0 0.0
        %500 = vmatprep.subr.mxu0 0.0
        %501 = vmatpush2.xpose.msra.mxu0 0.0
        %502 = vmatprep.subr.mxu0 0.0
        %503 = vmatpush2.xpose.msra.mxu0 0.0
        %504 = vmatprep.subr.mxu0 0.0
        %505 = vmatpush2.xpose.msra.mxu0 0.0
        %506 = vmatprep.subr.mxu0 0.0
        %507 = vmatpush2.xpose.msra.mxu0 0.0
        %508 = vmatprep.mubr.f32.mxu0 0.0
        %509 = vmatmul.mubr.f32.gmra.mxu0 %v439
        %v510 = vpop.f32.mrf.mxu0
        %v511 = vadd.f32 %v435, %v510
        %v512 = vpop.f32.mrf.mxu0
        %513 = vdwg.mxu0
        %v514 = vpack.c.bf16 %v511, %v511
        %v515 = vpack.c.bf16 %v344, %v344
        %v516 = vpack.c.bf16 %v346, %v346
        %v518 = vsel %vm437, %v514, 0
        %vm520 = vcmask 1043456
        %v522 = vsel %vm520, %v515, 0
        %v525 = vsel %vm520, %v516, 0
        %527 = vmatprep.subr.bf16.mxu0 0
        %528 = vmatpush1.bf16.msra.mxu0 0
        %529 = vmatprep.subr.bf16.mxu0 0
        %530 = vmatpush1.bf16.msra.mxu0 0
        %531 = vmatprep.subr.bf16.mxu0 0
        %532 = vmatpush1.bf16.msra.mxu0 0
        %533 = vmatprep.subr.bf16.mxu0 0
        %534 = vmatpush1.bf16.msra.mxu0 0
        %535 = vmatprep.subr.bf16.mxu0 0
        %536 = vmatpush1.bf16.msra.mxu0 0
        %537 = vmatprep.subr.bf16.mxu0 0
        %538 = vmatpush1.bf16.msra.mxu0 0
        %539 = vmatprep.subr.bf16.mxu0 0
        %540 = vmatpush1.bf16.msra.mxu0 0
        %541 = vmatprep.subr.bf16.mxu0 %v525
        %542 = vmatpush1.bf16.msra.mxu0 %v522
        %543 = vmatprep.subr.bf16.mxu0 0
        %544 = vmatpush2.bf16.msra.mxu0 0
        %545 = vmatprep.subr.bf16.mxu0 0
        %546 = vmatpush2.bf16.msra.mxu0 0
        %547 = vmatprep.subr.bf16.mxu0 0
        %548 = vmatpush2.bf16.msra.mxu0 0
        %549 = vmatprep.subr.bf16.mxu0 0
        %550 = vmatpush2.bf16.msra.mxu0 0
        %551 = vmatprep.subr.bf16.mxu0 0
        %552 = vmatpush2.bf16.msra.mxu0 0
        %553 = vmatprep.subr.bf16.mxu0 0
        %554 = vmatpush2.bf16.msra.mxu0 0
        %555 = vmatprep.subr.bf16.mxu0 0
        %556 = vmatpush2.bf16.msra.mxu0 0
        %557 = vmatprep.subr.bf16.mxu0 0
        %558 = vmatpush2.bf16.msra.mxu0 0
        %559 = vmatprep.mubr.bf16.mxu0 0
        %560 = vmatmul.mubr.bf16.gmra.mxu0 %v518
        %v561 = vpop.f32.mrf.mxu0
        %v562 = vadd.f32 0.0, %v561
        %v563 = vpop.f32.mrf.mxu0
        %v564 = vadd.f32 0.0, %v563
        %v565 = vpop.f32.mrf.mxu0
        %v566 = vpop.f32.mrf.mxu0
        %567 = vdwg.mxu0
        %v568 = vmul.f32 %v562, %v359
        %v569 = vmul.f32 %v564, %v360
        %v572 = vcombine.low %v568, %v569
        %574 = vst [vmem:[%s217] sm:$0xff] %v572
        %s575 = sand.u32 %s137, 1
        %s576 = scalar_lea.sflag [#allocation3], %s575
        %s577 = sand.u32 %s137, 1
        %s578 = smul.addr %s577, 8
        %s579 = scalar_lea.vmem [#allocation2], %s578
        // Predicated region
        $region41: #{tpu_custom_call.1} parent=39 // pred_check
          %p580 = pneg %p147
        $region42: #{tpu_custom_call.1} parent=39 // pred_check_branch
          %582 = sbr.rel (%p580) target = $region44
        $region43: #{tpu_custom_call.1} parent=39 // pred_region
          %s584 = ssub.s32 128, 128
          %585 = vsyncadd %s576, %s584
          %s586 = smul.addr %s19, 2
          %s587 = smul.addr %s586, 64
          %s588 = scalar_lea.hbm %s5, %s587
          %s590 = sshll.u32 %s579, 4
          %s591 = int_to_ptr.vmem [resolvable:$true] %s590
          %593 = dma.vmem_to_hbm [thread:$0]  %s591, 128, %s588, %s576
        $region44: #{tpu_custom_call.1} parent=39 // pred_fallthru
          _
      $region40: #{tpu_custom_call.1} parent=5 // pred_fallthru
        _
      %p594 = scmp.le.s32.totalorder 2, %s14
      // Predicated region
      $region45: #{tpu_custom_call.1} parent=5 // pred_check
        %p595 = pneg %p594
      $region46: #{tpu_custom_call.1} parent=5 // pred_check_branch
        %597 = sbr.rel (%p595) target = $region48
      $region47: #{tpu_custom_call.1} parent=5 // pred_region
        %s598 = ssub.s32 %s14, 2
        // Predicated region
        $region49: #{tpu_custom_call.1} parent=47 // pred_check
          %p599 = pneg %p153
        $region50: #{tpu_custom_call.1} parent=47 // pred_check_branch
          %601 = sbr.rel (%p599) target = $region52
        $region51: #{tpu_custom_call.1} parent=47 // pred_region
          %s602 = sand.u32 %s138, 1
          %s603 = scalar_lea.sflag [#allocation3], %s602
          %s604 = sand.u32 %s138, 1
          %s605 = smul.addr %s604, 8
          %s606 = scalar_lea.vmem [#allocation2], %s605
          %607 = dma.done %s603, 128
        $region52: #{tpu_custom_call.1} parent=47 // pred_fallthru
          _
      $region48: #{tpu_custom_call.1} parent=5 // pred_fallthru
        _
    $region6: #{tpu_custom_call.1} parent=1 // loop_footer
      %s18 = sadd.s32 1, %s14
    $region7: #{tpu_custom_call.1} parent=1 // loop_footer_branch
      %13 = sbr.rel target = $region3
    $region8: #{tpu_custom_call.1} parent=1 // loop_exit
      _
    %608 = vsyncpa [#allocation3], 1
    %s609 = scalar_lea.sflag [#allocation3], 1
    %610 = vsyncpa %s609, 1

</llo_original>
